<compile_context>
chip_gen: v5e
topology: v5e:2x2
jax: 0.10.0
libtpu: 0.0.40
codegen_flags: <defaults>
</compile_context>

<pallas_src>
import jax
import jax.numpy as jnp
from jax.experimental import pallas as pl
from jax.experimental.pallas import tpu as pltpu


def _round_up(x, m):
    return ((x + m - 1) // m) * m


def _net_kernel(sa_ref, w1t_ref, b1_ref, w2_ref, b2_ref, o_ref):
    # sa_ref : (5, T)   fused [s|a] activations, batch on the lane axis
    # w1t_ref: (40, 5)  fused layer-1 weight, transposed (resident)
    # b1_ref : (40, 1)  fused layer-1 bias b1s + b1a (resident)
    # w2_ref : (40, 1)  layer-2 weight (resident)
    # b2_ref : (1, 1)   layer-2 bias, SMEM scalar
    # o_ref  : (1, T)   lane-dense output
    sa = sa_ref[...]                       # (5, T)  f32
    w1t = w1t_ref[...]                     # (40, 5) f32

    # Layer 1: K=5 contraction as unrolled VPU broadcast-FMAs (too small for MXU).
    h = b1_ref[...]                        # (40, 1); broadcasts on first FMA
    for k in range(w1t.shape[1]):
        h = h + w1t[:, k:k + 1] * sa[k:k + 1, :]    # (40,1)*(1,T) -> (40,T)
    h = jnp.maximum(h, 0.0)                # ReLU

    # Layer 2 (40 -> 1): elementwise mul + cross-sublane reduce (XLU), lane-dense.
    out = jnp.sum(h * w2_ref[...], axis=0, keepdims=True) + b2_ref[0, 0]   # (1, T)
    o_ref[...] = out.astype(o_ref.dtype)


def net_forward(s, a, params, *, tile_b=2048):
    """s: (B, 4) float32, a: (B, 1) float32 -> (B, 1) float32."""
    w1s, b1s, w1a, b1a, w2, b2 = params
    B = s.shape[0]

    # ---- wrapper-side fusion of the two input branches (tiny one-time ops) ----
    w1_t = jnp.concatenate([w1s, w1a], axis=0).T.astype(jnp.float32)   # (40, 5)
    b1_c = (b1s + b1a).T.astype(jnp.float32)                           # (40, 1)
    w2_c = w2.astype(jnp.float32)                                      # (40, 1)
    b2_s = b2.reshape(1, 1).astype(jnp.float32)                        # (1, 1) -> SMEM

    # ---- lane-dense, batch-tiled activations: (features, batch) ----
    tile = _round_up(min(int(tile_b), _round_up(B, 128)), 128)         # mult. of 128
    b_pad = _round_up(B, tile)

    sa = jnp.concatenate([s, a], axis=1).astype(jnp.float32)           # (B, 5)
    sa_t = jnp.pad(sa, ((0, b_pad - B), (0, 0))).T                     # (5, Bp)

    grid = (b_pad // tile,)

    out_t = pl.pallas_call(
        _net_kernel,
        out_shape=jax.ShapeDtypeStruct((1, b_pad), jnp.float32),
        grid=grid,
        in_specs=[
            pl.BlockSpec((5, tile), lambda i: (0, i)),          # activations (streamed)
            pl.BlockSpec((40, 5), lambda i: (0, 0)),            # w1^T  (resident)
            pl.BlockSpec((40, 1), lambda i: (0, 0)),            # b1    (resident)
            pl.BlockSpec((40, 1), lambda i: (0, 0)),            # w2    (resident)
            pl.BlockSpec(memory_space=pltpu.MemorySpace.SMEM),  # b2 scalar
        ],
        out_specs=pl.BlockSpec((1, tile), lambda i: (0, i)),
        compiler_params=pltpu.CompilerParams(
            dimension_semantics=("parallel",)),
    )(sa_t, w1_t, b1_c, w2_c, b2_s)

    return out_t[:, :B].T                                              # (B, 1)


def init_params(key):
    """Deterministic init mimicking PyTorch Linear default (U[-1/sqrt(fan_in), ...])."""
    def linear(key, fan_in, fan_out):
        kw, kb = jax.random.split(key)
        bound = 1.0 / (fan_in ** 0.5)
        w = jax.random.uniform(kw, (fan_in, fan_out), jnp.float32, -bound, bound)
        b = jax.random.uniform(kb, (1, fan_out), jnp.float32, -bound, bound)
        return w, b

    k1, k2, k3 = jax.random.split(key, 3)
    w1s, b1s = linear(k1, 4, 40)    # fc1_s: Linear(4, 40)
    w1a, b1a = linear(k2, 1, 40)    # fc1_a: Linear(1, 40)
    w2,  b2  = linear(k3, 40, 1)    # fc2:   Linear(40, 1)
    return (w1s, b1s, w1a, b1a, w2, b2)


def reference_forward(s, a, params):
    w1s, b1s, w1a, b1a, w2, b2 = params
    h = jnp.maximum(s @ w1s + b1s + a @ w1a + b1a, 0.0)
    return h @ w2 + b2


if __name__ == "__main__":
    key = jax.random.PRNGKey(0)
    kp, ks, ka = jax.random.split(key, 3)

    params = init_params(kp)

    # small batch (pads to one 128-lane tile)
    B = 8
    s = jax.random.normal(ks, (B, 4), dtype=jnp.float32)   # state
    a = jax.random.normal(ka, (B, 1), dtype=jnp.float32)   # action

    out = jax.block_until_ready(net_forward(s, a, params))
    ref = reference_forward(s, a, params)
    assert out.shape == (B, 1)
    assert jnp.allclose(out, ref, atol=1e-4, rtol=1e-4), "mismatch vs reference (B=8)"

    # batch that is not a multiple of 128 exercises the padding path
    B2 = 200
    s2 = jax.random.normal(jax.random.PRNGKey(1), (B2, 4), dtype=jnp.float32)
    a2 = jax.random.normal(jax.random.PRNGKey(2), (B2, 1), dtype=jnp.float32)
    out2 = jax.block_until_ready(net_forward(s2, a2, params))
    ref2 = reference_forward(s2, a2, params)
    assert out2.shape == (B2, 1)
    assert jnp.allclose(out2, ref2, atol=1e-4, rtol=1e-4), "mismatch vs reference (B=200)"

    print("KERNEL_OK")
</pallas_src>

<mosaic_0001>
module attributes {stable_mosaic.version = 11 : i64} {
  func.func @_net_kernel(%arg0: i32, %arg1: memref<5x128xf32, #tpu.memory_space<vmem>>, %arg2: memref<40x5xf32, #tpu.memory_space<vmem>>, %arg3: memref<40x1xf32, #tpu.memory_space<vmem>>, %arg4: memref<40x1xf32, #tpu.memory_space<vmem>>, %arg5: memref<1x1xf32, #tpu.memory_space<smem>>, %arg6: memref<1x128xf32, #tpu.memory_space<vmem>>) attributes {dimension_semantics = [#tpu.dimension_semantics<parallel>], iteration_bounds = array<i64: 1>, scalar_prefetch = 0 : i64, scratch_operands = 0 : i64, tpu.core_type = #tpu.core_type<tc>, window_params = [{transform_indices = @transform_0, window_bounds = array<i64: 5, 128>}, {pipeline_mode = #tpu.pipeline_mode<synchronous>, transform_indices = @transform_1, window_bounds = array<i64: 40, 5>}, {pipeline_mode = #tpu.pipeline_mode<synchronous>, transform_indices = @transform_2, window_bounds = array<i64: 40, 1>}, {pipeline_mode = #tpu.pipeline_mode<synchronous>, transform_indices = @transform_3, window_bounds = array<i64: 40, 1>}, {transform_indices = @transform_4, window_bounds = array<i64: 1, 1>}, {transform_indices = @transform_5, window_bounds = array<i64: 1, 128>}]} {
    %c0 = arith.constant 0 : index
    %c0_0 = arith.constant 0 : index
    %0 = vector.load %arg1[%c0, %c0_0] : memref<5x128xf32, #tpu.memory_space<vmem>>, vector<5x128xf32>
    %c0_1 = arith.constant 0 : index
    %c0_2 = arith.constant 0 : index
    %1 = vector.load %arg2[%c0_1, %c0_2] : memref<40x5xf32, #tpu.memory_space<vmem>>, vector<40x5xf32>
    %c0_3 = arith.constant 0 : index
    %c0_4 = arith.constant 0 : index
    %2 = vector.load %arg3[%c0_3, %c0_4] : memref<40x1xf32, #tpu.memory_space<vmem>>, vector<40x1xf32>
    %3 = vector.extract_strided_slice %1 {offsets = [0, 0], sizes = [40, 1], strides = [1, 1]} : vector<40x5xf32> to vector<40x1xf32>
    %4 = vector.extract_strided_slice %0 {offsets = [0, 0], sizes = [1, 128], strides = [1, 1]} : vector<5x128xf32> to vector<1x128xf32>
    %5 = vector.broadcast %3 : vector<40x1xf32> to vector<40x128xf32>
    %6 = vector.broadcast %4 : vector<1x128xf32> to vector<40x128xf32>
    %7 = arith.mulf %5, %6 : vector<40x128xf32>
    %8 = vector.broadcast %2 : vector<40x1xf32> to vector<40x128xf32>
    %9 = arith.addf %8, %7 : vector<40x128xf32>
    %10 = vector.extract_strided_slice %1 {offsets = [0, 1], sizes = [40, 1], strides = [1, 1]} : vector<40x5xf32> to vector<40x1xf32>
    %11 = vector.extract_strided_slice %0 {offsets = [1, 0], sizes = [1, 128], strides = [1, 1]} : vector<5x128xf32> to vector<1x128xf32>
    %12 = vector.broadcast %10 : vector<40x1xf32> to vector<40x128xf32>
    %13 = vector.broadcast %11 : vector<1x128xf32> to vector<40x128xf32>
    %14 = arith.mulf %12, %13 : vector<40x128xf32>
    %15 = arith.addf %9, %14 : vector<40x128xf32>
    %16 = vector.extract_strided_slice %1 {offsets = [0, 2], sizes = [40, 1], strides = [1, 1]} : vector<40x5xf32> to vector<40x1xf32>
    %17 = vector.extract_strided_slice %0 {offsets = [2, 0], sizes = [1, 128], strides = [1, 1]} : vector<5x128xf32> to vector<1x128xf32>
    %18 = vector.broadcast %16 : vector<40x1xf32> to vector<40x128xf32>
    %19 = vector.broadcast %17 : vector<1x128xf32> to vector<40x128xf32>
    %20 = arith.mulf %18, %19 : vector<40x128xf32>
    %21 = arith.addf %15, %20 : vector<40x128xf32>
    %22 = vector.extract_strided_slice %1 {offsets = [0, 3], sizes = [40, 1], strides = [1, 1]} : vector<40x5xf32> to vector<40x1xf32>
    %23 = vector.extract_strided_slice %0 {offsets = [3, 0], sizes = [1, 128], strides = [1, 1]} : vector<5x128xf32> to vector<1x128xf32>
    %24 = vector.broadcast %22 : vector<40x1xf32> to vector<40x128xf32>
    %25 = vector.broadcast %23 : vector<1x128xf32> to vector<40x128xf32>
    %26 = arith.mulf %24, %25 : vector<40x128xf32>
    %27 = arith.addf %21, %26 : vector<40x128xf32>
    %28 = vector.extract_strided_slice %1 {offsets = [0, 4], sizes = [40, 1], strides = [1, 1]} : vector<40x5xf32> to vector<40x1xf32>
    %29 = vector.extract_strided_slice %0 {offsets = [4, 0], sizes = [1, 128], strides = [1, 1]} : vector<5x128xf32> to vector<1x128xf32>
    %30 = vector.broadcast %28 : vector<40x1xf32> to vector<40x128xf32>
    %31 = vector.broadcast %29 : vector<1x128xf32> to vector<40x128xf32>
    %32 = arith.mulf %30, %31 : vector<40x128xf32>
    %33 = arith.addf %27, %32 : vector<40x128xf32>
    %cst = arith.constant 0.000000e+00 : f32
    %34 = vector.broadcast %cst : f32 to vector<40x128xf32>
    %35 = arith.maximumf %33, %34 : vector<40x128xf32>
    %c0_5 = arith.constant 0 : index
    %c0_6 = arith.constant 0 : index
    %36 = vector.load %arg4[%c0_5, %c0_6] : memref<40x1xf32, #tpu.memory_space<vmem>>, vector<40x1xf32>
    %37 = vector.broadcast %36 : vector<40x1xf32> to vector<40x128xf32>
    %38 = arith.mulf %35, %37 : vector<40x128xf32>
    %cst_7 = arith.constant dense<0.000000e+00> : vector<128xf32>
    %39 = vector.multi_reduction <add>, %38, %cst_7 [0] : vector<40x128xf32> to vector<128xf32>
    %40 = vector.shape_cast %39 : vector<128xf32> to vector<1x128xf32>
    %c0_8 = arith.constant 0 : index
    %c0_9 = arith.constant 0 : index
    %41 = memref.load %arg5[%c0_8, %c0_9] : memref<1x1xf32, #tpu.memory_space<smem>>
    %42 = vector.broadcast %41 : f32 to vector<1x128xf32>
    %43 = arith.addf %40, %42 : vector<1x128xf32>
    %c0_10 = arith.constant 0 : index
    %c0_11 = arith.constant 0 : index
    %44 = vector.load %arg6[%c0_10, %c0_11] : memref<1x128xf32, #tpu.memory_space<vmem>>, vector<1x128xf32>
    tpu.vector_store %arg6[%c0_10, %c0_11], %43 {strides = array<i32>} : memref<1x128xf32, #tpu.memory_space<vmem>>, vector<1x128xf32>,
    return
  }
  func.func @transform_0(%arg0: i32) -> (i32, i32) {
    %c0_i32 = arith.constant 0 : i32
    %c0_i32_0 = arith.constant 0 : i32
    return %c0_i32, %arg0 : i32, i32
  }
  func.func @transform_1(%arg0: i32) -> (i32, i32) {
    %c0_i32 = arith.constant 0 : i32
    %c0_i32_0 = arith.constant 0 : i32
    %c0_i32_1 = arith.constant 0 : i32
    return %c0_i32, %c0_i32_0 : i32, i32
  }
  func.func @transform_2(%arg0: i32) -> (i32, i32) {
    %c0_i32 = arith.constant 0 : i32
    %c0_i32_0 = arith.constant 0 : i32
    %c0_i32_1 = arith.constant 0 : i32
    return %c0_i32, %c0_i32_0 : i32, i32
  }
  func.func @transform_3(%arg0: i32) -> (i32, i32) {
    %c0_i32 = arith.constant 0 : i32
    %c0_i32_0 = arith.constant 0 : i32
    %c0_i32_1 = arith.constant 0 : i32
    return %c0_i32, %c0_i32_0 : i32, i32
  }
  func.func @transform_4(%arg0: i32) -> (i32, i32) {
    %c0_i32 = arith.constant 0 : i32
    %c0_i32_0 = arith.constant 0 : i32
    %c0_i32_1 = arith.constant 0 : i32
    return %c0_i32, %c0_i32_0 : i32, i32
  }
  func.func @transform_5(%arg0: i32) -> (i32, i32) {
    %c0_i32 = arith.constant 0 : i32
    %c0_i32_0 = arith.constant 0 : i32
    return %c0_i32, %arg0 : i32, i32
  }
}

</mosaic_0001>

<llo_original>
// kernel: tpu_custom_call.1
$region0: #{tpu_custom_call.1}
  #allocation0 [shape = 'u32[]', space=smem, size = 0x4, offset = 0x4, fixed_abs, tag = 'smem constant byte address 0x4 - core index']
  #allocation1 [shape = 'u32[72,128]{1,0:T(1,128)}', space=vmem, size = 0x9000, scoped, tag = 'internal scratch']
  #allocation2 [shape = 'f32[1,1]{1,0:T(1,128)S(6)}', space=smem, size = 0x200, scoped, tag = 'scoped memory for tpu_custom_call.1']
  %s0 = inlined_call_operand.vmem [shape: f32[5,128], index: 0, kind: input, shape index: {}]
  %s1 = inlined_call_operand.vmem [shape: f32[40,5], index: 1, kind: input, shape index: {}]
  %s2 = inlined_call_operand.vmem [shape: f32[40,1], index: 2, kind: input, shape index: {}]
  %s3 = inlined_call_operand.vmem [shape: f32[40,1], index: 3, kind: input, shape index: {}]
  %s4 = inlined_call_operand.<no memory space> [shape: f32[1,1], index: 4, kind: input, shape index: {}]
  %s5 = inlined_call_operand.hbm [shape: f32[1,128], index: 5, kind: output, shape index: {}]
  %s6 = sld [smem:[#allocation0]]
  $region30: #{tpu_custom_call.1} parent=0
    _
  %s8 = ssub.s32 1, %s6
  %s9 = scalar_select 0, %s8, %s6
  %10 = sst [smem:[#allocation2]] %s4
  $region1: #{tpu_custom_call.1} parent=0
    #allocation3 [shape = 'u8[512]{0}', space=vmem, size = 0x400, scoped, tag = 'output window, operand 0, single buffered']
    #allocation4 [shape = 's32[1]{0}', space=sflag, size = 0x4, scoped, tag = 'scoped memory for tpu_custom_call.1']
    %11 = vsyncpa [#allocation4], 0
    // Predicated region
    $region2: #{tpu_custom_call.1} parent=1 // pred_check
      _
    $region3: #{tpu_custom_call.1} parent=1 // pred_check_branch
      %13 = sbr.rel (0) target = $region5
    $region4: #{tpu_custom_call.1} parent=1 // pred_region
      _
    $region5: #{tpu_custom_call.1} parent=1 // pred_fallthru
      _
    // Predicated region
    $region6: #{tpu_custom_call.1} parent=1 // pred_check
      _
    $region7: #{tpu_custom_call.1} parent=1 // pred_check_branch
      %15 = sbr.rel (0) target = $region9
    $region8: #{tpu_custom_call.1} parent=1 // pred_region
      _
    $region9: #{tpu_custom_call.1} parent=1 // pred_fallthru
      _
    // Predicated region
    $region10: #{tpu_custom_call.1} parent=1 // pred_check
      _
    $region11: #{tpu_custom_call.1} parent=1 // pred_check_branch
      %17 = sbr.rel (0) target = $region13
    $region12: #{tpu_custom_call.1} parent=1 // pred_region
      _
    $region13: #{tpu_custom_call.1} parent=1 // pred_fallthru
      _
    // Predicated region
    $region14: #{tpu_custom_call.1} parent=1 // pred_check
      _
    $region15: #{tpu_custom_call.1} parent=1 // pred_check_branch
      %19 = sbr.rel (0) target = $region17
    $region16: #{tpu_custom_call.1} parent=1 // pred_region
      _
    $region17: #{tpu_custom_call.1} parent=1 // pred_fallthru
      _
    // Predicated region
    $region18: #{tpu_custom_call.1} parent=1 // pred_check
      _
    $region19: #{tpu_custom_call.1} parent=1 // pred_check_branch
      %21 = sbr.rel (0) target = $region21
    $region20: #{tpu_custom_call.1} parent=1 // pred_region
      _
    $region21: #{tpu_custom_call.1} parent=1 // pred_fallthru
      _
    %v22 = vld [vmem:[%s0] sm:$0x1f]
    %v23 = vld [vmem:[%s1] sm:$0xff]
    %v24 = vld [vmem:[%s1 + $0x8] sm:$0xff]
    %v25 = vld [vmem:[%s1 + $0x10] sm:$0xff]
    %v26 = vld [vmem:[%s1 + $0x18] sm:$0xff]
    %v27 = vld [vmem:[%s1 + $0x20] sm:$0xff]
    %v28 = vld [vmem:[%s2] sm:$0xff]
    %v29 = vld [vmem:[%s2 + $0x8] sm:$0xff]
    %v30 = vld [vmem:[%s2 + $0x10] sm:$0xff]
    %v31 = vld [vmem:[%s2 + $0x18] sm:$0xff]
    %v32 = vld [vmem:[%s2 + $0x20] sm:$0xff]
    %34 = vset.pattern.permute.xlu0 0
    %35 = vperm.xlu0 %34, %v23
    %v36 = vpop.permute.xlu0 %35
    %39 = vset.pattern.permute.xlu0 0
    %40 = vperm.xlu0 %39, %v24
    %v41 = vpop.permute.xlu0 %40
    %44 = vset.pattern.permute.xlu0 0
    %45 = vperm.xlu0 %44, %v25
    %v46 = vpop.permute.xlu0 %45
    %49 = vset.pattern.permute.xlu0 0
    %50 = vperm.xlu0 %49, %v26
    %v51 = vpop.permute.xlu0 %50
    %54 = vset.pattern.permute.xlu0 0
    %55 = vperm.xlu0 %54, %v27
    %v56 = vpop.permute.xlu0 %55
    %v58 = vperm.slane %v22, 0
    %v59 = vmul.f32 %v36, %v58
    %v60 = vmul.f32 %v41, %v58
    %v61 = vmul.f32 %v46, %v58
    %v62 = vmul.f32 %v51, %v58
    %v63 = vmul.f32 %v56, %v58
    %65 = vset.pattern.permute.xlu0 0
    %66 = vperm.xlu0 %65, %v28
    %v67 = vpop.permute.xlu0 %66
    %70 = vset.pattern.permute.xlu0 0
    %71 = vperm.xlu0 %70, %v29
    %v72 = vpop.permute.xlu0 %71
    %75 = vset.pattern.permute.xlu0 0
    %76 = vperm.xlu0 %75, %v30
    %v77 = vpop.permute.xlu0 %76
    %80 = vset.pattern.permute.xlu0 0
    %81 = vperm.xlu0 %80, %v31
    %v82 = vpop.permute.xlu0 %81
    %85 = vset.pattern.permute.xlu0 0
    %86 = vperm.xlu0 %85, %v32
    %v87 = vpop.permute.xlu0 %86
    %v89 = vadd.f32 %v67, %v59
    %v90 = vadd.f32 %v72, %v60
    %v91 = vadd.f32 %v77, %v61
    %v92 = vadd.f32 %v82, %v62
    %v93 = vadd.f32 %v87, %v63
    %94 = vset.pattern.permute.xlu0 1
    %95 = vperm.xlu0 %94, %v23
    %v96 = vpop.permute.xlu0 %95
    %98 = vset.pattern.permute.xlu0 1
    %99 = vperm.xlu0 %98, %v24
    %v100 = vpop.permute.xlu0 %99
    %102 = vset.pattern.permute.xlu0 1
    %103 = vperm.xlu0 %102, %v25
    %v104 = vpop.permute.xlu0 %103
    %106 = vset.pattern.permute.xlu0 1
    %107 = vperm.xlu0 %106, %v26
    %v108 = vpop.permute.xlu0 %107
    %110 = vset.pattern.permute.xlu0 1
    %111 = vperm.xlu0 %110, %v27
    %v112 = vpop.permute.xlu0 %111
    %v114 = vperm.slane %v22, 1
    %v115 = vmul.f32 %v96, %v114
    %v116 = vmul.f32 %v100, %v114
    %v117 = vmul.f32 %v104, %v114
    %v118 = vmul.f32 %v108, %v114
    %v119 = vmul.f32 %v112, %v114
    %v120 = vadd.f32 %v89, %v115
    %v121 = vadd.f32 %v90, %v116
    %v122 = vadd.f32 %v91, %v117
    %v123 = vadd.f32 %v92, %v118
    %v124 = vadd.f32 %v93, %v119
    %125 = vset.pattern.permute.xlu0 2
    %126 = vperm.xlu0 %125, %v23
    %v127 = vpop.permute.xlu0 %126
    %129 = vset.pattern.permute.xlu0 2
    %130 = vperm.xlu0 %129, %v24
    %v131 = vpop.permute.xlu0 %130
    %133 = vset.pattern.permute.xlu0 2
    %134 = vperm.xlu0 %133, %v25
    %v135 = vpop.permute.xlu0 %134
    %137 = vset.pattern.permute.xlu0 2
    %138 = vperm.xlu0 %137, %v26
    %v139 = vpop.permute.xlu0 %138
    %141 = vset.pattern.permute.xlu0 2
    %142 = vperm.xlu0 %141, %v27
    %v143 = vpop.permute.xlu0 %142
    %v145 = vperm.slane %v22, 2
    %v146 = vmul.f32 %v127, %v145
    %v147 = vmul.f32 %v131, %v145
    %v148 = vmul.f32 %v135, %v145
    %v149 = vmul.f32 %v139, %v145
    %v150 = vmul.f32 %v143, %v145
    %v151 = vadd.f32 %v120, %v146
    %v152 = vadd.f32 %v121, %v147
    %v153 = vadd.f32 %v122, %v148
    %v154 = vadd.f32 %v123, %v149
    %v155 = vadd.f32 %v124, %v150
    %156 = vset.pattern.permute.xlu0 3
    %157 = vperm.xlu0 %156, %v23
    %v158 = vpop.permute.xlu0 %157
    %160 = vset.pattern.permute.xlu0 3
    %161 = vperm.xlu0 %160, %v24
    %v162 = vpop.permute.xlu0 %161
    %164 = vset.pattern.permute.xlu0 3
    %165 = vperm.xlu0 %164, %v25
    %v166 = vpop.permute.xlu0 %165
    %168 = vset.pattern.permute.xlu0 3
    %169 = vperm.xlu0 %168, %v26
    %v170 = vpop.permute.xlu0 %169
    %172 = vset.pattern.permute.xlu0 3
    %173 = vperm.xlu0 %172, %v27
    %v174 = vpop.permute.xlu0 %173
    %v176 = vperm.slane %v22, 3
    %v177 = vmul.f32 %v158, %v176
    %v178 = vmul.f32 %v162, %v176
    %v179 = vmul.f32 %v166, %v176
    %v180 = vmul.f32 %v170, %v176
    %v181 = vmul.f32 %v174, %v176
    %v182 = vadd.f32 %v151, %v177
    %v183 = vadd.f32 %v152, %v178
    %v184 = vadd.f32 %v153, %v179
    %v185 = vadd.f32 %v154, %v180
    %v186 = vadd.f32 %v155, %v181
    %187 = vset.pattern.permute.xlu0 4
    %188 = vperm.xlu0 %187, %v23
    %v189 = vpop.permute.xlu0 %188
    %191 = vset.pattern.permute.xlu0 4
    %192 = vperm.xlu0 %191, %v24
    %v193 = vpop.permute.xlu0 %192
    %195 = vset.pattern.permute.xlu0 4
    %196 = vperm.xlu0 %195, %v25
    %v197 = vpop.permute.xlu0 %196
    %199 = vset.pattern.permute.xlu0 4
    %200 = vperm.xlu0 %199, %v26
    %v201 = vpop.permute.xlu0 %200
    %203 = vset.pattern.permute.xlu0 4
    %204 = vperm.xlu0 %203, %v27
    %v205 = vpop.permute.xlu0 %204
    %v207 = vperm.slane %v22, 4
    %v208 = vmul.f32 %v189, %v207
    %v209 = vmul.f32 %v193, %v207
    %v210 = vmul.f32 %v197, %v207
    %v211 = vmul.f32 %v201, %v207
    %v212 = vmul.f32 %v205, %v207
    %v213 = vadd.f32 %v182, %v208
    %v214 = vadd.f32 %v183, %v209
    %v215 = vadd.f32 %v184, %v210
    %v216 = vadd.f32 %v185, %v211
    %v217 = vadd.f32 %v186, %v212
    %v218 = vmax.f32 %v213, 0.0
    %v219 = vmax.f32 %v214, 0.0
    %v220 = vmax.f32 %v215, 0.0
    %v221 = vmax.f32 %v216, 0.0
    %v222 = vmax.f32 %v217, 0.0
    %v223 = vld [vmem:[%s3] sm:$0xff]
    %v224 = vld [vmem:[%s3 + $0x8] sm:$0xff]
    %v225 = vld [vmem:[%s3 + $0x10] sm:$0xff]
    %v226 = vld [vmem:[%s3 + $0x18] sm:$0xff]
    %v227 = vld [vmem:[%s3 + $0x20] sm:$0xff]
    %229 = vset.pattern.permute.xlu0 0
    %230 = vperm.xlu0 %229, %v223
    %v231 = vpop.permute.xlu0 %230
    %234 = vset.pattern.permute.xlu0 0
    %235 = vperm.xlu0 %234, %v224
    %v236 = vpop.permute.xlu0 %235
    %239 = vset.pattern.permute.xlu0 0
    %240 = vperm.xlu0 %239, %v225
    %v241 = vpop.permute.xlu0 %240
    %244 = vset.pattern.permute.xlu0 0
    %245 = vperm.xlu0 %244, %v226
    %v246 = vpop.permute.xlu0 %245
    %249 = vset.pattern.permute.xlu0 0
    %250 = vperm.xlu0 %249, %v227
    %v251 = vpop.permute.xlu0 %250
    %v253 = vmul.f32 %v218, %v231
    %v254 = vmul.f32 %v219, %v236
    %v255 = vmul.f32 %v220, %v241
    %v256 = vmul.f32 %v221, %v246
    %v257 = vmul.f32 %v222, %v251
    %v258 = vadd.f32 %v253, %v254
    %v259 = vadd.f32 %v258, %v255
    %v260 = vadd.f32 %v259, %v256
    %v261 = vadd.f32 %v260, %v257
    %v262 = vrot.slane %v261, 4
    %v263 = vadd.f32 %v261, %v262
    %v264 = vrot.slane %v263, 2
    %v265 = vadd.f32 %v263, %v264
    %v266 = vrot.slane %v265, 1
    %v267 = vadd.f32 %v265, %v266
    %s268 = sld [smem:[#allocation2]]
    %v269 = vstv %s268
    %v270 = vadd.f32 %v267, %v269
    %271 = vst [vmem:[#allocation3] sm:$0x1] %v270
    // Predicated region
    $region22: #{tpu_custom_call.1} parent=1 // pred_check
      _
    $region23: #{tpu_custom_call.1} parent=1 // pred_check_branch
      %273 = sbr.rel (0) target = $region25
    $region24: #{tpu_custom_call.1} parent=1 // pred_region
      %275 = vsyncadd [#allocation4], 0
      %s277 = sshll.u32 [#allocation3], 4
      %s278 = int_to_ptr.vmem [resolvable:$true] %s277
      %s279 = sshll.u32 %s5, 4
      %s280 = int_to_ptr.hbm [resolvable:$true] %s279
      %282 = dma.vmem_to_hbm [thread:$0]  %s278, 16, %s280, [#allocation4]
    $region25: #{tpu_custom_call.1} parent=1 // pred_fallthru
      _
    // Predicated region
    $region26: #{tpu_custom_call.1} parent=1 // pred_check
      _
    $region27: #{tpu_custom_call.1} parent=1 // pred_check_branch
      %284 = sbr.rel (0) target = $region29
    $region28: #{tpu_custom_call.1} parent=1 // pred_region
      %286 = dma.done [#allocation4], 16
    $region29: #{tpu_custom_call.1} parent=1 // pred_fallthru
      _
    %287 = vsyncpa [#allocation4], 1

</llo_original>
